<compile_context>
chip_gen: v7x
topology: tpu7x:2x2x1
jax: 0.10.0
libtpu: 0.0.40
codegen_flags: <defaults>
</compile_context>

<pallas_src>
import jax
import jax.numpy as jnp
from jax import lax
from jax.experimental import pallas as pl
from jax.experimental.pallas import tpu as pltpu


# ----------------------------------------------------------------------------
# Kernels
# ----------------------------------------------------------------------------

def _softmax_prologue_kernel(x_ref, w_ref, s_ref):
    """s[r, :] = softmax(x[r, :] @ W^T) for the rows of this tile."""
    # Contract dim 1 of x with dim 1 of w -> logits = x @ W^T with no
    # in-kernel transpose of the weight (MXU consumes w directly).
    logits = lax.dot_general(
        x_ref[...], w_ref[...], (((1,), (1,)), ((), ())),
        preferred_element_type=jnp.float32)                  # (tr, H)
    m = jnp.max(logits, axis=1, keepdims=True)
    e = jnp.exp(logits - m)
    l = jnp.sum(e, axis=1, keepdims=True)
    # Exact reciprocal keeps the 1e-5 parity check against the f32 reference.
    s_ref[...] = (e * pl.reciprocal(l, approx=False)).astype(s_ref.dtype)


def _broadcast_mul_kernel(s_ref, x_ref, out_ref):
    """out[h, n, f] = s[h, f] * x[n, f] for this (h-tile, n-tile) block."""
    s = s_ref[...]                                           # (th, H)
    xn = x_ref[...]                                          # (tn, F)
    out_ref[...] = (s[:, None, :] * xn[None, :, :]).astype(out_ref.dtype)


# ----------------------------------------------------------------------------
# Tile selection
# ----------------------------------------------------------------------------

# Conservative so the double-buffered blocks fit v7x's 64 MiB/TC VMEM.
# On v5e/v6e (128 MiB VMEM) this could be raised toward ~96 MiB for even
# larger writeback blocks.
_VMEM_TILE_BUDGET = 40 * 1024 * 1024
_VMEM_LIMIT_BYTES = 48 * 1024 * 1024


def _largest_aligned_divisor(dim, cap):
    """Largest divisor of `dim` that is a multiple of 8 and <= cap."""
    cap = min(dim, max(int(cap), 8))
    start = cap - (cap % 8)
    for t in range(start, 7, -8):
        if dim % t == 0:
            return t
    return dim  # full extent is always a legal block


def _pick_tiles(H, N, F, itemsize=4, budget=_VMEM_TILE_BUDGET):
    """Pick (th, tn): maximize tn first (contiguous writeback), then th."""
    def usage(th, tn):
        # double-buffered: output block + s block + x block
        return 2 * itemsize * (th * tn * F + th * H + tn * F)

    tn = N
    while usage(8, tn) > budget and tn > 8:
        tn = _largest_aligned_divisor(N, tn // 2)

    # Cap th at H//2 so grid[0] >= 2: both v7x TensorCores drive writeback.
    th_cap = H // 2 if H >= 16 else H
    th = _largest_aligned_divisor(H, th_cap)
    while usage(th, tn) > budget and th > 8:
        th = _largest_aligned_divisor(H, th // 2)
    return th, tn


# ----------------------------------------------------------------------------
# Wrapper
# ----------------------------------------------------------------------------

def attention_forward(x, w, hypothesis_cnt, *, th=None, tn=None,
                      out_dtype=jnp.float32):
    N, F = x.shape
    H = hypothesis_cnt
    assert w.shape == (H, F)
    # The torch forward's tile/broadcast only type-checks when
    # batch == in_features == hypothesis_cnt; guard so a wrong-but-shaped
    # result can never be produced silently.
    assert N == F and H == F, (
        "Attention forward requires batch == in_features == hypothesis_cnt")
    assert F % 128 == 0, "lane-dense blocks require F to be a multiple of 128"

    # ---------------- Stage 1: s = softmax(x @ W^T, dim=1) ----------------
    # Tiny prologue (one matmul + softmax total); traffic ~3*N*F*4 bytes,
    # negligible vs the H*N*F*4-byte output of stage 2.
    tr = _largest_aligned_divisor(N, 256)
    prologue_cost = pl.CostEstimate(
        flops=2 * N * F * H,
        transcendentals=N * H,
        bytes_accessed=4 * (N * F + H * F + N * H),
    )
    s = pl.pallas_call(
        _softmax_prologue_kernel,
        out_shape=jax.ShapeDtypeStruct((N, H), jnp.float32),
        grid_spec=pltpu.PrefetchScalarGridSpec(
            num_scalar_prefetch=0,
            grid=(N // tr,),
            in_specs=[
                pl.BlockSpec((tr, F), lambda r: (r, 0)),   # rows of x
                pl.BlockSpec((H, F), lambda r: (0, 0)),    # full weight, resident
            ],
            out_specs=pl.BlockSpec((tr, H), lambda r: (r, 0)),
        ),
        compiler_params=pltpu.CompilerParams(
            dimension_semantics=("parallel",),
            vmem_limit_bytes=_VMEM_LIMIT_BYTES,
        ),
        cost_estimate=prologue_cost,
    )(x, w)

    # ---------------- Stage 2: out[h, n, f] = s[h, f] * x[n, f] ----------------
    if th is None or tn is None:
        th_auto, tn_auto = _pick_tiles(H, N, F)
        th = th_auto if th is None else th
        tn = tn_auto if tn is None else tn
    assert H % th == 0 and N % tn == 0, "tile sizes must divide H and N"
    assert th % 8 == 0 and tn % 8 == 0, "sublane alignment (f32: multiples of 8)"

    grid = (H // th, N // tn)

    # Advisory estimate reflecting actual traffic of the mem-bound kernel:
    # full output write, x re-read once per h-tile, s read once.
    main_cost = pl.CostEstimate(
        flops=H * N * F,
        transcendentals=0,
        bytes_accessed=4 * (H * N * F + (H // th) * N * F + N * H),
    )

    out = pl.pallas_call(
        _broadcast_mul_kernel,
        out_shape=jax.ShapeDtypeStruct((H, N, F), out_dtype),
        grid_spec=pltpu.PrefetchScalarGridSpec(
            num_scalar_prefetch=0,
            grid=grid,
            in_specs=[
                # softmax rows h0..h0+th (block index unchanged across ni ->
                # not re-fetched on consecutive inner steps).
                pl.BlockSpec((th, H), lambda hi, ni: (hi, 0)),
                # x rows being scaled for this n-tile.
                pl.BlockSpec((tn, F), lambda hi, ni: (ni, 0)),
            ],
            out_specs=pl.BlockSpec((th, tn, F), lambda hi, ni: (hi, ni, 0)),
        ),
        compiler_params=pltpu.CompilerParams(
            # Independent output tiles on both axes -> megacore sharding on
            # v7x; with th <= H//2 both TensorCores issue writeback DMAs.
            dimension_semantics=("parallel", "parallel"),
            vmem_limit_bytes=_VMEM_LIMIT_BYTES,
        ),
        cost_estimate=main_cost,
    )(s, x)
    return out


def attention_ref(x, w, hypothesis_cnt):
    """Plain-JAX reference (mirrors the torch forward)."""
    o = x @ w.T
    s = jax.nn.softmax(o, axis=1)
    return s[:hypothesis_cnt][:, None, :] * x[None, :, :]


if __name__ == "__main__":
    key = jax.random.PRNGKey(0)
    kx, kw = jax.random.split(key)

    # torch forward's tile/broadcast requires batch == in_features and
    # hypothesis_cnt == in_features; pick a lane-aligned, small instance.
    N = F = H = 128

    x = jax.random.normal(kx, (N, F), dtype=jnp.float32)
    # Deterministic nn.Linear-style init: U(-1/sqrt(F), 1/sqrt(F)).
    bound = 1.0 / (F ** 0.5)
    w = jax.random.uniform(kw, (H, F), dtype=jnp.float32,
                           minval=-bound, maxval=bound)

    # Auto-tiling picks th=64, tn=128 -> grid (2, 1), one contiguous 64 KiB
    # store per output h-row, both TCs busy on v7x.
    out = attention_forward(x, w, H)
    out = jax.block_until_ready(out)

    ref = attention_ref(x, w, H)
    assert out.shape == (H, N, F), out.shape
    assert jnp.allclose(out, ref, atol=1e-5, rtol=1e-5), "mismatch vs reference"

    print("KERNEL_OK")
</pallas_src>

<mosaic_0001>
module attributes {stable_mosaic.version = 11 : i64} {
  func.func @_softmax_prologue_kernel(%arg0: i32, %arg1: memref<128x128xf32, #tpu.memory_space<vmem>>, %arg2: memref<128x128xf32, #tpu.memory_space<vmem>>, %arg3: memref<128x128xf32, #tpu.memory_space<vmem>>) attributes {dimension_semantics = [#tpu.dimension_semantics<parallel>], iteration_bounds = array<i64: 1>, scalar_prefetch = 0 : i64, scratch_operands = 0 : i64, tpu.core_type = #tpu.core_type<tc>, window_params = [{transform_indices = @transform_0, window_bounds = array<i64: 128, 128>}, {pipeline_mode = #tpu.pipeline_mode<synchronous>, transform_indices = @transform_1, window_bounds = array<i64: 128, 128>}, {transform_indices = @transform_2, window_bounds = array<i64: 128, 128>}]} {
    %c0 = arith.constant 0 : index
    %c0_0 = arith.constant 0 : index
    %0 = vector.load %arg1[%c0, %c0_0] : memref<128x128xf32, #tpu.memory_space<vmem>>, vector<128x128xf32>
    %c0_1 = arith.constant 0 : index
    %c0_2 = arith.constant 0 : index
    %1 = vector.load %arg2[%c0_1, %c0_2] : memref<128x128xf32, #tpu.memory_space<vmem>>, vector<128x128xf32>
    %cst = arith.constant dense<0.000000e+00> : vector<128x128xf32>
    %2 = tpu.matmul %0, %1, %cst {dimension_numbers = #tpu.dot_dimension_numbers<[1], [1], [0], [0], [0, 0, 1, 0], [], []>} : vector<128x128xf32>, vector<128x128xf32>, vector<128x128xf32> -> vector<128x128xf32>
    %cst_3 = arith.constant dense<0xFF800000> : vector<128xf32>
    %3 = vector.multi_reduction <maximumf>, %2, %cst_3 [1] : vector<128x128xf32> to vector<128xf32>
    %4 = vector.shape_cast %3 : vector<128xf32> to vector<128x1xf32>
    %5 = vector.broadcast %4 : vector<128x1xf32> to vector<128x128xf32>
    %6 = arith.subf %2, %5 : vector<128x128xf32>
    %7 = math.exp %6 : vector<128x128xf32>
    %cst_4 = arith.constant dense<0.000000e+00> : vector<128xf32>
    %8 = vector.multi_reduction <add>, %7, %cst_4 [1] : vector<128x128xf32> to vector<128xf32>
    %9 = vector.shape_cast %8 : vector<128xf32> to vector<128x1xf32>
    %10 = tpu.reciprocal %9 : vector<128x1xf32> -> vector<128x1xf32>
    %11 = vector.broadcast %10 : vector<128x1xf32> to vector<128x128xf32>
    %12 = arith.mulf %7, %11 : vector<128x128xf32>
    %c0_5 = arith.constant 0 : index
    %c0_6 = arith.constant 0 : index
    %13 = vector.load %arg3[%c0_5, %c0_6] : memref<128x128xf32, #tpu.memory_space<vmem>>, vector<128x128xf32>
    tpu.vector_store %arg3[%c0_5, %c0_6], %12 {strides = array<i32>} : memref<128x128xf32, #tpu.memory_space<vmem>>, vector<128x128xf32>,
    return
  }
  func.func @transform_0(%arg0: i32) -> (i32, i32) {
    %c0_i32 = arith.constant 0 : i32
    %c0_i32_0 = arith.constant 0 : i32
    return %arg0, %c0_i32 : i32, i32
  }
  func.func @transform_1(%arg0: i32) -> (i32, i32) {
    %c0_i32 = arith.constant 0 : i32
    %c0_i32_0 = arith.constant 0 : i32
    %c0_i32_1 = arith.constant 0 : i32
    return %c0_i32, %c0_i32_0 : i32, i32
  }
  func.func @transform_2(%arg0: i32) -> (i32, i32) {
    %c0_i32 = arith.constant 0 : i32
    %c0_i32_0 = arith.constant 0 : i32
    return %arg0, %c0_i32 : i32, i32
  }
}

</mosaic_0001>

<llo_original>
// kernel: tpu_custom_call.1
$region0: #{tpu_custom_call.1}
  #allocation0 [shape = 'u32[]', space=smem, size = 0x4, offset = 0x4, fixed_abs, tag = 'smem constant byte address 0x4 - core index']
  #allocation1 [shape = 'u32[144,128]{1,0:T(1,128)}', space=vmem, size = 0x12000, scoped, tag = 'internal scratch']
  %s0 = inlined_call_operand.hbm [shape: f32[128,128], index: 0, kind: input, shape index: {}]
  %s1 = inlined_call_operand.hbm [shape: f32[128,128], index: 1, kind: input, shape index: {}]
  %s2 = inlined_call_operand.hbm [shape: f32[128,128], index: 2, kind: output, shape index: {}]
  %s3 = sld [smem:[#allocation0]]
  $region26: #{tpu_custom_call.1} parent=0
    _
  %s5 = ssub.s32 1, %s3
  %s6 = scalar_select 0, %s5, %s3
  $region1: #{tpu_custom_call.1} parent=0
    #allocation2 [shape = 'u8[65536]{0}', space=vmem, size = 0x10000, scoped, tag = 'input window, operand 0, single buffered']
    #allocation3 [shape = 's32[1]{0}', space=sflag, size = 0x4, scoped, tag = 'scoped memory for tpu_custom_call.1']
    #allocation4 [shape = 's32[1]{0}', space=sflag, size = 0x4, scoped, tag = 'scoped memory for tpu_custom_call.1']
    #allocation5 [shape = 'u8[65536]{0}', space=vmem, size = 0x10000, scoped, tag = 'input window, operand 1, single buffered']
    #allocation6 [shape = 's32[1]{0}', space=sflag, size = 0x4, scoped, tag = 'scoped memory for tpu_custom_call.1']
    #allocation7 [shape = 'u8[65536]{0}', space=vmem, size = 0x10000, scoped, tag = 'output window, operand 0, single buffered']
    %7 = vsyncpa [#allocation3], 0
    %8 = vsyncpa [#allocation6], 0
    %9 = vsyncpa [#allocation4], 0
    // Predicated region
    $region2: #{tpu_custom_call.1} parent=1 // pred_check
      _
    $region3: #{tpu_custom_call.1} parent=1 // pred_check_branch
      %11 = sbr.rel (0) target = $region5
    $region4: #{tpu_custom_call.1} parent=1 // pred_region
      %s13 = ssub.s32 2048, 2048
      %14 = vsyncadd [#allocation3], %s13
      %s15 = sshll.u32 [#allocation2], 4
      %s16 = int_to_ptr.vmem [resolvable:$true] %s15
      %21 = dma.hbm_to_vmem [thread:$0]  %s0, 2048, %s16, [#allocation3], 128, 128, 8
    $region5: #{tpu_custom_call.1} parent=1 // pred_fallthru
      _
    // Predicated region
    $region6: #{tpu_custom_call.1} parent=1 // pred_check
      _
    $region7: #{tpu_custom_call.1} parent=1 // pred_check_branch
      %23 = sbr.rel (0) target = $region9
    $region8: #{tpu_custom_call.1} parent=1 // pred_region
      %s25 = ssub.s32 2048, 2048
      %26 = vsyncadd [#allocation6], %s25
      %s27 = sshll.u32 [#allocation5], 4
      %s28 = int_to_ptr.vmem [resolvable:$true] %s27
      %33 = dma.hbm_to_vmem [thread:$0]  %s1, 2048, %s28, [#allocation6], 128, 128, 8
    $region9: #{tpu_custom_call.1} parent=1 // pred_fallthru
      _
    // Predicated region
    $region10: #{tpu_custom_call.1} parent=1 // pred_check
      _
    $region11: #{tpu_custom_call.1} parent=1 // pred_check_branch
      %35 = sbr.rel (0) target = $region13
    $region12: #{tpu_custom_call.1} parent=1 // pred_region
      %36 = dma.done [#allocation3], 2048
    $region13: #{tpu_custom_call.1} parent=1 // pred_fallthru
      _
    // Predicated region
    $region14: #{tpu_custom_call.1} parent=1 // pred_check
      _
    $region15: #{tpu_custom_call.1} parent=1 // pred_check_branch
      %38 = sbr.rel (0) target = $region17
    $region16: #{tpu_custom_call.1} parent=1 // pred_region
      %39 = dma.done [#allocation6], 2048
    $region17: #{tpu_custom_call.1} parent=1 // pred_fallthru
      _
    %v40 = vld [vmem:[#allocation2] sm:$0xff]
    %v41 = vld [vmem:[#allocation2 + $0x8] sm:$0xff]
    %v42 = vld [vmem:[#allocation2 + $0x10] sm:$0xff]
    %v43 = vld [vmem:[#allocation2 + $0x18] sm:$0xff]
    %v44 = vld [vmem:[#allocation2 + $0x20] sm:$0xff]
    %v45 = vld [vmem:[#allocation2 + $0x28] sm:$0xff]
    %v46 = vld [vmem:[#allocation2 + $0x30] sm:$0xff]
    %v47 = vld [vmem:[#allocation2 + $0x38] sm:$0xff]
    %v48 = vld [vmem:[#allocation2 + $0x40] sm:$0xff]
    %v49 = vld [vmem:[#allocation2 + $0x48] sm:$0xff]
    %v50 = vld [vmem:[#allocation2 + $0x50] sm:$0xff]
    %v51 = vld [vmem:[#allocation2 + $0x58] sm:$0xff]
    %v52 = vld [vmem:[#allocation2 + $0x60] sm:$0xff]
    %v53 = vld [vmem:[#allocation2 + $0x68] sm:$0xff]
    %v54 = vld [vmem:[#allocation2 + $0x70] sm:$0xff]
    %v55 = vld [vmem:[#allocation2 + $0x78] sm:$0xff]
    %v56 = vld [vmem:[#allocation5] sm:$0xff]
    %v57 = vld [vmem:[#allocation5 + $0x8] sm:$0xff]
    %v58 = vld [vmem:[#allocation5 + $0x10] sm:$0xff]
    %v59 = vld [vmem:[#allocation5 + $0x18] sm:$0xff]
    %v60 = vld [vmem:[#allocation5 + $0x20] sm:$0xff]
    %v61 = vld [vmem:[#allocation5 + $0x28] sm:$0xff]
    %v62 = vld [vmem:[#allocation5 + $0x30] sm:$0xff]
    %v63 = vld [vmem:[#allocation5 + $0x38] sm:$0xff]
    %v64 = vld [vmem:[#allocation5 + $0x40] sm:$0xff]
    %v65 = vld [vmem:[#allocation5 + $0x48] sm:$0xff]
    %v66 = vld [vmem:[#allocation5 + $0x50] sm:$0xff]
    %v67 = vld [vmem:[#allocation5 + $0x58] sm:$0xff]
    %v68 = vld [vmem:[#allocation5 + $0x60] sm:$0xff]
    %v69 = vld [vmem:[#allocation5 + $0x68] sm:$0xff]
    %v70 = vld [vmem:[#allocation5 + $0x70] sm:$0xff]
    %v71 = vld [vmem:[#allocation5 + $0x78] sm:$0xff]
    %72 = vmatprep.subr.mxu0 0.0
    %73 = vmatpush1.xpose.msra.mxu0 %v56
    %74 = vmatprep.subr.mxu0 0.0
    %75 = vmatpush1.xpose.msra.mxu0 %v57
    %76 = vmatprep.subr.mxu0 0.0
    %77 = vmatpush1.xpose.msra.mxu0 %v58
    %78 = vmatprep.subr.mxu0 0.0
    %79 = vmatpush1.xpose.msra.mxu0 %v59
    %80 = vmatprep.subr.mxu0 0.0
    %81 = vmatpush1.xpose.msra.mxu0 %v60
    %82 = vmatprep.subr.mxu0 0.0
    %83 = vmatpush1.xpose.msra.mxu0 %v61
    %84 = vmatprep.subr.mxu0 0.0
    %85 = vmatpush1.xpose.msra.mxu0 %v62
    %86 = vmatprep.subr.mxu0 0.0
    %87 = vmatpush1.xpose.msra.mxu0 %v63
    %88 = vmatprep.subr.mxu0 0.0
    %89 = vmatpush1.xpose.msra.mxu0 %v64
    %90 = vmatprep.subr.mxu0 0.0
    %91 = vmatpush1.xpose.msra.mxu0 %v65
    %92 = vmatprep.subr.mxu0 0.0
    %93 = vmatpush1.xpose.msra.mxu0 %v66
    %94 = vmatprep.subr.mxu0 0.0
    %95 = vmatpush1.xpose.msra.mxu0 %v67
    %96 = vmatprep.subr.mxu0 0.0
    %97 = vmatpush1.xpose.msra.mxu0 %v68
    %98 = vmatprep.subr.mxu0 0.0
    %99 = vmatpush1.xpose.msra.mxu0 %v69
    %100 = vmatprep.subr.mxu0 0.0
    %101 = vmatpush1.xpose.msra.mxu0 %v70
    %102 = vmatprep.subr.mxu0 0.0
    %103 = vmatpush1.xpose.msra.mxu0 %v71
    %104 = vmatprep.subr.mxu0 0.0
    %105 = vmatpush1.xpose.msra.mxu0 0.0
    %106 = vmatprep.subr.mxu0 0.0
    %107 = vmatpush1.xpose.msra.mxu0 0.0
    %108 = vmatprep.subr.mxu0 0.0
    %109 = vmatpush1.xpose.msra.mxu0 0.0
    %110 = vmatprep.subr.mxu0 0.0
    %111 = vmatpush1.xpose.msra.mxu0 0.0
    %112 = vmatprep.subr.mxu0 0.0
    %113 = vmatpush1.xpose.msra.mxu0 0.0
    %114 = vmatprep.subr.mxu0 0.0
    %115 = vmatpush1.xpose.msra.mxu0 0.0
    %116 = vmatprep.subr.mxu0 0.0
    %117 = vmatpush1.xpose.msra.mxu0 0.0
    %118 = vmatprep.subr.mxu0 0.0
    %119 = vmatpush1.xpose.msra.mxu0 0.0
    %120 = vmatprep.subr.mxu0 0.0
    %121 = vmatpush1.xpose.msra.mxu0 0.0
    %122 = vmatprep.subr.mxu0 0.0
    %123 = vmatpush1.xpose.msra.mxu0 0.0
    %124 = vmatprep.subr.mxu0 0.0
    %125 = vmatpush1.xpose.msra.mxu0 0.0
    %126 = vmatprep.subr.mxu0 0.0
    %127 = vmatpush1.xpose.msra.mxu0 0.0
    %128 = vmatprep.subr.mxu0 0.0
    %129 = vmatpush1.xpose.msra.mxu0 0.0
    %130 = vmatprep.subr.mxu0 0.0
    %131 = vmatpush1.xpose.msra.mxu0 0.0
    %132 = vmatprep.subr.mxu0 0.0
    %133 = vmatpush1.xpose.msra.mxu0 0.0
    %134 = vmatprep.subr.mxu0 0.0
    %135 = vmatpush1.xpose.msra.mxu0 0.0
    %136 = vmatprep.mubr.f32.mxu0 0.0
    %137 = vmatmul.mubr.f32.gmra.mrb[0].mxu0 %v40
    %v138 = vpop.f32.mrb[0].mxu0
    %v139 = vadd.f32 0.0, %v138
    %v140 = vpop.f32.mrb[0].mxu0
    %141 = vmatprep.mubr.f32.mxu0 0.0
    %142 = vmatmul.mubr.f32.gmra.mrb[0].mxu0 %v41
    %v143 = vpop.f32.mrb[0].mxu0
    %v144 = vadd.f32 0.0, %v143
    %v145 = vpop.f32.mrb[0].mxu0
    %146 = vmatprep.mubr.f32.mxu0 0.0
    %147 = vmatmul.mubr.f32.gmra.mrb[0].mxu0 %v42
    %v148 = vpop.f32.mrb[0].mxu0
    %v149 = vadd.f32 0.0, %v148
    %v150 = vpop.f32.mrb[0].mxu0
    %151 = vmatprep.mubr.f32.mxu0 0.0
    %152 = vmatmul.mubr.f32.gmra.mrb[0].mxu0 %v43
    %v153 = vpop.f32.mrb[0].mxu0
    %v154 = vadd.f32 0.0, %v153
    %v155 = vpop.f32.mrb[0].mxu0
    %156 = vmatprep.mubr.f32.mxu0 0.0
    %157 = vmatmul.mubr.f32.gmra.mrb[0].mxu0 %v44
    %v158 = vpop.f32.mrb[0].mxu0
    %v159 = vadd.f32 0.0, %v158
    %v160 = vpop.f32.mrb[0].mxu0
    %161 = vmatprep.mubr.f32.mxu0 0.0
    %162 = vmatmul.mubr.f32.gmra.mrb[0].mxu0 %v45
    %v163 = vpop.f32.mrb[0].mxu0
    %v164 = vadd.f32 0.0, %v163
    %v165 = vpop.f32.mrb[0].mxu0
    %166 = vmatprep.mubr.f32.mxu0 0.0
    %167 = vmatmul.mubr.f32.gmra.mrb[0].mxu0 %v46
    %v168 = vpop.f32.mrb[0].mxu0
    %v169 = vadd.f32 0.0, %v168
    %v170 = vpop.f32.mrb[0].mxu0
    %171 = vmatprep.mubr.f32.mxu0 0.0
    %172 = vmatmul.mubr.f32.gmra.mrb[0].mxu0 %v47
    %v173 = vpop.f32.mrb[0].mxu0
    %v174 = vadd.f32 0.0, %v173
    %v175 = vpop.f32.mrb[0].mxu0
    %176 = vmatprep.mubr.f32.mxu0 0.0
    %177 = vmatmul.mubr.f32.gmra.mrb[0].mxu0 %v48
    %v178 = vpop.f32.mrb[0].mxu0
    %v179 = vadd.f32 0.0, %v178
    %v180 = vpop.f32.mrb[0].mxu0
    %181 = vmatprep.mubr.f32.mxu0 0.0
    %182 = vmatmul.mubr.f32.gmra.mrb[0].mxu0 %v49
    %v183 = vpop.f32.mrb[0].mxu0
    %v184 = vadd.f32 0.0, %v183
    %v185 = vpop.f32.mrb[0].mxu0
    %186 = vmatprep.mubr.f32.mxu0 0.0
    %187 = vmatmul.mubr.f32.gmra.mrb[0].mxu0 %v50
    %v188 = vpop.f32.mrb[0].mxu0
    %v189 = vadd.f32 0.0, %v188
    %v190 = vpop.f32.mrb[0].mxu0
    %191 = vmatprep.mubr.f32.mxu0 0.0
    %192 = vmatmul.mubr.f32.gmra.mrb[0].mxu0 %v51
    %v193 = vpop.f32.mrb[0].mxu0
    %v194 = vadd.f32 0.0, %v193
    %v195 = vpop.f32.mrb[0].mxu0
    %196 = vmatprep.mubr.f32.mxu0 0.0
    %197 = vmatmul.mubr.f32.gmra.mrb[0].mxu0 %v52
    %v198 = vpop.f32.mrb[0].mxu0
    %v199 = vadd.f32 0.0, %v198
    %v200 = vpop.f32.mrb[0].mxu0
    %201 = vmatprep.mubr.f32.mxu0 0.0
    %202 = vmatmul.mubr.f32.gmra.mrb[0].mxu0 %v53
    %v203 = vpop.f32.mrb[0].mxu0
    %v204 = vadd.f32 0.0, %v203
    %v205 = vpop.f32.mrb[0].mxu0
    %206 = vmatprep.mubr.f32.mxu0 0.0
    %207 = vmatmul.mubr.f32.gmra.mrb[0].mxu0 %v54
    %v208 = vpop.f32.mrb[0].mxu0
    %v209 = vadd.f32 0.0, %v208
    %v210 = vpop.f32.mrb[0].mxu0
    %211 = vmatprep.mubr.f32.mxu0 0.0
    %212 = vmatmul.mubr.f32.gmra.mrb[0].mxu0 %v55
    %v213 = vpop.f32.mrb[0].mxu0
    %v214 = vadd.f32 0.0, %v213
    %v215 = vpop.f32.mrb[0].mxu0
    %216 = vdwg.mxu0
    %217 = vmax.xlane.f32.xlu0 %v139
    %v218 = vpop.xlane.xlu0 %217
    %219 = vmax.xlane.f32.xlu0 %v144
    %v220 = vpop.xlane.xlu0 %219
    %221 = vmax.xlane.f32.xlu0 %v149
    %v222 = vpop.xlane.xlu0 %221
    %223 = vmax.xlane.f32.xlu0 %v154
    %v224 = vpop.xlane.xlu0 %223
    %225 = vmax.xlane.f32.xlu0 %v159
    %v226 = vpop.xlane.xlu0 %225
    %227 = vmax.xlane.f32.xlu0 %v164
    %v228 = vpop.xlane.xlu0 %227
    %229 = vmax.xlane.f32.xlu0 %v169
    %v230 = vpop.xlane.xlu0 %229
    %231 = vmax.xlane.f32.xlu0 %v174
    %v232 = vpop.xlane.xlu0 %231
    %233 = vmax.xlane.f32.xlu0 %v179
    %v234 = vpop.xlane.xlu0 %233
    %235 = vmax.xlane.f32.xlu0 %v184
    %v236 = vpop.xlane.xlu0 %235
    %237 = vmax.xlane.f32.xlu0 %v189
    %v238 = vpop.xlane.xlu0 %237
    %239 = vmax.xlane.f32.xlu0 %v194
    %v240 = vpop.xlane.xlu0 %239
    %241 = vmax.xlane.f32.xlu0 %v199
    %v242 = vpop.xlane.xlu0 %241
    %243 = vmax.xlane.f32.xlu0 %v204
    %v244 = vpop.xlane.xlu0 %243
    %245 = vmax.xlane.f32.xlu0 %v209
    %v246 = vpop.xlane.xlu0 %245
    %247 = vmax.xlane.f32.xlu0 %v214
    %v248 = vpop.xlane.xlu0 %247
    %v249 = vsub.f32 %v139, %v218
    %v250 = vsub.f32 %v144, %v220
    %v251 = vsub.f32 %v149, %v222
    %v252 = vsub.f32 %v154, %v224
    %v253 = vsub.f32 %v159, %v226
    %v254 = vsub.f32 %v164, %v228
    %v255 = vsub.f32 %v169, %v230
    %v256 = vsub.f32 %v174, %v232
    %v257 = vsub.f32 %v179, %v234
    %v258 = vsub.f32 %v184, %v236
    %v259 = vsub.f32 %v189, %v238
    %v260 = vsub.f32 %v194, %v240
    %v261 = vsub.f32 %v199, %v242
    %v262 = vsub.f32 %v204, %v244
    %v263 = vsub.f32 %v209, %v246
    %v264 = vsub.f32 %v214, %v248
    %v265 = vmul.f32 %v249, 1.442695
    %v266 = vpow.pop %v265
    %v267 = vmul.f32 %v250, 1.442695
    %v268 = vpow.pop %v267
    %v269 = vmul.f32 %v251, 1.442695
    %v270 = vpow.pop %v269
    %v271 = vmul.f32 %v252, 1.442695
    %v272 = vpow.pop %v271
    %v273 = vmul.f32 %v253, 1.442695
    %v274 = vpow.pop %v273
    %v275 = vmul.f32 %v254, 1.442695
    %v276 = vpow.pop %v275
    %v277 = vmul.f32 %v255, 1.442695
    %v278 = vpow.pop %v277
    %v279 = vmul.f32 %v256, 1.442695
    %v280 = vpow.pop %v279
    %v281 = vmul.f32 %v257, 1.442695
    %v282 = vpow.pop %v281
    %v283 = vmul.f32 %v258, 1.442695
    %v284 = vpow.pop %v283
    %v285 = vmul.f32 %v259, 1.442695
    %v286 = vpow.pop %v285
    %v287 = vmul.f32 %v260, 1.442695
    %v288 = vpow.pop %v287
    %v289 = vmul.f32 %v261, 1.442695
    %v290 = vpow.pop %v289
    %v291 = vmul.f32 %v262, 1.442695
    %v292 = vpow.pop %v291
    %v293 = vmul.f32 %v263, 1.442695
    %v294 = vpow.pop %v293
    %v295 = vmul.f32 %v264, 1.442695
    %v296 = vpow.pop %v295
    %297 = vadd.xlane.f32.xlu0 %v266
    %v298 = vpop.xlane.xlu0 %297
    %299 = vadd.xlane.f32.xlu0 %v268
    %v300 = vpop.xlane.xlu0 %299
    %301 = vadd.xlane.f32.xlu0 %v270
    %v302 = vpop.xlane.xlu0 %301
    %303 = vadd.xlane.f32.xlu0 %v272
    %v304 = vpop.xlane.xlu0 %303
    %305 = vadd.xlane.f32.xlu0 %v274
    %v306 = vpop.xlane.xlu0 %305
    %307 = vadd.xlane.f32.xlu0 %v276
    %v308 = vpop.xlane.xlu0 %307
    %309 = vadd.xlane.f32.xlu0 %v278
    %v310 = vpop.xlane.xlu0 %309
    %311 = vadd.xlane.f32.xlu0 %v280
    %v312 = vpop.xlane.xlu0 %311
    %313 = vadd.xlane.f32.xlu0 %v282
    %v314 = vpop.xlane.xlu0 %313
    %315 = vadd.xlane.f32.xlu0 %v284
    %v316 = vpop.xlane.xlu0 %315
    %317 = vadd.xlane.f32.xlu0 %v286
    %v318 = vpop.xlane.xlu0 %317
    %319 = vadd.xlane.f32.xlu0 %v288
    %v320 = vpop.xlane.xlu0 %319
    %321 = vadd.xlane.f32.xlu0 %v290
    %v322 = vpop.xlane.xlu0 %321
    %323 = vadd.xlane.f32.xlu0 %v292
    %v324 = vpop.xlane.xlu0 %323
    %325 = vadd.xlane.f32.xlu0 %v294
    %v326 = vpop.xlane.xlu0 %325
    %327 = vadd.xlane.f32.xlu0 %v296
    %v328 = vpop.xlane.xlu0 %327
    %v329 = vrcp.pop %v298
    %v330 = vrcp.pop %v300
    %v331 = vrcp.pop %v302
    %v332 = vrcp.pop %v304
    %v333 = vrcp.pop %v306
    %v334 = vrcp.pop %v308
    %v335 = vrcp.pop %v310
    %v336 = vrcp.pop %v312
    %v337 = vrcp.pop %v314
    %v338 = vrcp.pop %v316
    %v339 = vrcp.pop %v318
    %v340 = vrcp.pop %v320
    %v341 = vrcp.pop %v322
    %v342 = vrcp.pop %v324
    %v343 = vrcp.pop %v326
    %v344 = vrcp.pop %v328
    %v345 = vmul.f32 %v266, %v329
    %v346 = vmul.f32 %v268, %v330
    %v347 = vmul.f32 %v270, %v331
    %v348 = vmul.f32 %v272, %v332
    %v349 = vmul.f32 %v274, %v333
    %v350 = vmul.f32 %v276, %v334
    %v351 = vmul.f32 %v278, %v335
    %v352 = vmul.f32 %v280, %v336
    %v353 = vmul.f32 %v282, %v337
    %v354 = vmul.f32 %v284, %v338
    %v355 = vmul.f32 %v286, %v339
    %v356 = vmul.f32 %v288, %v340
    %v357 = vmul.f32 %v290, %v341
    %v358 = vmul.f32 %v292, %v342
    %v359 = vmul.f32 %v294, %v343
    %v360 = vmul.f32 %v296, %v344
    %361 = vst [vmem:[#allocation7] sm:$0xff] %v345
    %362 = vst [vmem:[#allocation7 + $0x8] sm:$0xff] %v346
    %363 = vst [vmem:[#allocation7 + $0x10] sm:$0xff] %v347
    %364 = vst [vmem:[#allocation7 + $0x18] sm:$0xff] %v348
    %365 = vst [vmem:[#allocation7 + $0x20] sm:$0xff] %v349
    %366 = vst [vmem:[#allocation7 + $0x28] sm:$0xff] %v350
    %367 = vst [vmem:[#allocation7 + $0x30] sm:$0xff] %v351
    %368 = vst [vmem:[#allocation7 + $0x38] sm:$0xff] %v352
    %369 = vst [vmem:[#allocation7 + $0x40] sm:$0xff] %v353
    %370 = vst [vmem:[#allocation7 + $0x48] sm:$0xff] %v354
    %371 = vst [vmem:[#allocation7 + $0x50] sm:$0xff] %v355
    %372 = vst [vmem:[#allocation7 + $0x58] sm:$0xff] %v356
    %373 = vst [vmem:[#allocation7 + $0x60] sm:$0xff] %v357
    %374 = vst [vmem:[#allocation7 + $0x68] sm:$0xff] %v358
    %375 = vst [vmem:[#allocation7 + $0x70] sm:$0xff] %v359
    %376 = vst [vmem:[#allocation7 + $0x78] sm:$0xff] %v360
    // Predicated region
    $region18: #{tpu_custom_call.1} parent=1 // pred_check
      _
    $region19: #{tpu_custom_call.1} parent=1 // pred_check_branch
      %378 = sbr.rel (0) target = $region21
    $region20: #{tpu_custom_call.1} parent=1 // pred_region
      %s380 = ssub.s32 2048, 2048
      %381 = vsyncadd [#allocation4], %s380
      %s382 = sshll.u32 [#allocation7], 4
      %s383 = int_to_ptr.vmem [resolvable:$true] %s382
      %388 = dma.vmem_to_hbm [thread:$0]  %s383, 2048, %s2, [#allocation4], 128, 128, 8
    $region21: #{tpu_custom_call.1} parent=1 // pred_fallthru
      _
    // Predicated region
    $region22: #{tpu_custom_call.1} parent=1 // pred_check
      _
    $region23: #{tpu_custom_call.1} parent=1 // pred_check_branch
      %390 = sbr.rel (0) target = $region25
    $region24: #{tpu_custom_call.1} parent=1 // pred_region
      %391 = dma.done [#allocation4], 2048
    $region25: #{tpu_custom_call.1} parent=1 // pred_fallthru
      _
    %392 = vsyncpa [#allocation3], 1
    %393 = vsyncpa [#allocation6], 1
    %394 = vsyncpa [#allocation4], 1

</llo_original>
